<compile_context>
chip_gen: v5e
topology: v5e:2x2
jax: 0.10.0
libtpu: 0.0.40
codegen_flags: <defaults>
</compile_context>

<pallas_src>
import functools

import jax
import jax.numpy as jnp
from jax.experimental import pallas as pl
from jax.experimental.pallas import tpu as pltpu


# ------------------------------- kernels ------------------------------------


def _se_fused_kernel(x_ref, w1s_ref, w2_ref, o_ref):
    """Grid (B,). Whole (C, HW) slab resident: squeeze + excite + scale."""
    x = x_ref[...]                                                 # (C, HW)
    # Spatial SUM over lanes; 1/HW is pre-folded into w1s.
    y = jnp.sum(x.astype(jnp.float32), axis=-1, keepdims=True)     # (C, 1)
    h = jnp.maximum(
        jnp.dot(w1s_ref[...], y, preferred_element_type=jnp.float32), 0.0)  # (hid, 1)
    s = jax.nn.sigmoid(
        jnp.dot(w2_ref[...], h, preferred_element_type=jnp.float32))        # (C, 1)
    o_ref[...] = (x * s.astype(x.dtype)).astype(o_ref.dtype)


def _se_squeeze_kernel(x_ref, pooled_ref, *, hw_total):
    """Grid (B, n_hw). Accumulate channel sums into the resident (C,1) block."""
    t = pl.program_id(1)

    @pl.when(t == 0)
    def _():
        pooled_ref[...] = jnp.zeros_like(pooled_ref)

    x = x_ref[...].astype(jnp.float32)                             # (C, hw_tile)
    hw_tile = x.shape[-1]
    if hw_total % hw_tile != 0:
        # Mask lanes past the true spatial extent (padded partial last tile).
        lane = jax.lax.broadcasted_iota(jnp.int32, x.shape, 1)
        x = jnp.where(lane + t * hw_tile < hw_total, x, 0.0)
    pooled_ref[...] += jnp.sum(x, axis=-1, keepdims=True)          # (C, 1)


def _se_scale_kernel(x_ref, s_ref, o_ref):
    """Grid (B, n_hw). out = x * s, s broadcast across lanes."""
    o_ref[...] = (x_ref[...] * s_ref[...].astype(x_ref.dtype)).astype(o_ref.dtype)


# ------------------------------- helpers ------------------------------------


def _choose_hw_tile(hw, c, itemsize, max_bytes):
    """Lane tile (multiple of 128) keeping a (C, tile) block under max_bytes;
    if the whole extent fits (or hw <= 128), use the full extent."""
    lanes = max(128, (max_bytes // max(c * itemsize, 1)) // 128 * 128)
    if lanes >= hw:
        return int(hw)
    return int(lanes)


def _vmem_limit(*buffer_bytes, margin=4 << 20, cap=48 << 20):
    """Double-buffered pipeline blocks + margin, clamped for v7x's 64 MiB."""
    need = 2 * sum(buffer_bytes) + margin
    return int(min(max(need, 16 << 20), cap))


# ------------------------------- wrapper ------------------------------------


def se_layer(x, w1, w2, *, fused_max_slab_bytes=4 << 20, tile_max_bytes=4 << 20):
    """x: (B, C, H, W); w1: (C//r, C); w2: (C, C//r). nn.Linear weights, no bias."""
    B, C, H, W = x.shape
    HW = H * W
    hidden = w1.shape[0]
    itemsize = x.dtype.itemsize

    # Free reshape — no HBM data movement, unlike an NCHW->NHWC transpose.
    xr = x.reshape(B, C, HW)
    slab_bytes = C * HW * itemsize

    # ---------------- Fused path: per-batch slab resident in VMEM ----------
    if slab_bytes <= fused_max_slab_bytes:
        w1s = (w1.astype(jnp.float32) / float(HW))                 # (hidden, C)
        w2f = w2.astype(jnp.float32)                               # (C, hidden)
        w_bytes = (w1s.size + w2f.size) * 4
        out = pl.pallas_call(
            _se_fused_kernel,
            out_shape=jax.ShapeDtypeStruct((B, C, HW), x.dtype),
            grid=(B,),
            in_specs=[
                pl.BlockSpec((None, C, HW), lambda b: (b, 0, 0)),
                pl.BlockSpec((hidden, C), lambda b: (0, 0)),
                pl.BlockSpec((C, hidden), lambda b: (0, 0)),
            ],
            out_specs=pl.BlockSpec((None, C, HW), lambda b: (b, 0, 0)),
            compiler_params=pltpu.CompilerParams(
                dimension_semantics=("parallel",),
                vmem_limit_bytes=_vmem_limit(slab_bytes, slab_bytes, w_bytes)),
        )(xr, w1s, w2f)
        return out.reshape(B, C, H, W)

    # ---------------- Fallback: two-pass, HW tiled on lanes ----------------
    hw_tile = _choose_hw_tile(HW, C, itemsize, tile_max_bytes)
    n_hw = pl.cdiv(HW, hw_tile)
    blk_bytes = C * hw_tile * itemsize
    s_bytes = C * 4

    pooled = pl.pallas_call(
        functools.partial(_se_squeeze_kernel, hw_total=HW),
        out_shape=jax.ShapeDtypeStruct((B, C, 1), jnp.float32),
        grid=(B, n_hw),
        in_specs=[pl.BlockSpec((None, C, hw_tile), lambda b, t: (b, 0, t))],
        out_specs=pl.BlockSpec((None, C, 1), lambda b, t: (b, 0, 0)),
        compiler_params=pltpu.CompilerParams(
            dimension_semantics=("parallel", "arbitrary"),
            vmem_limit_bytes=_vmem_limit(blk_bytes, s_bytes)),
    )(xr)

    # Tiny batched excite (B x C) in plain XLA — keeps weights out of the
    # bandwidth-bound Pallas pipelines and feeds the MXU B rows at once.
    y = pooled[:, :, 0] * (1.0 / float(HW))                         # (B, C) mean
    h = jnp.maximum(y @ w1.astype(jnp.float32).T, 0.0)              # (B, hidden)
    s = jax.nn.sigmoid(h @ w2.astype(jnp.float32).T)[:, :, None]    # (B, C, 1)

    out = pl.pallas_call(
        _se_scale_kernel,
        out_shape=jax.ShapeDtypeStruct((B, C, HW), x.dtype),
        grid=(B, n_hw),
        in_specs=[
            pl.BlockSpec((None, C, hw_tile), lambda b, t: (b, 0, t)),
            pl.BlockSpec((None, C, 1), lambda b, t: (b, 0, 0)),
        ],
        out_specs=pl.BlockSpec((None, C, hw_tile), lambda b, t: (b, 0, t)),
        compiler_params=pltpu.CompilerParams(
            dimension_semantics=("parallel", "parallel"),
            vmem_limit_bytes=_vmem_limit(blk_bytes, blk_bytes, s_bytes)),
    )(xr, s)
    return out.reshape(B, C, H, W)


# ------------------------------- reference ----------------------------------


def se_layer_ref(x, w1, w2):
    y = jnp.mean(x, axis=(2, 3))                                    # (B, C)
    h = jnp.maximum(y @ w1.T, 0.0)
    s = jax.nn.sigmoid(h @ w2.T)
    return x * s[:, :, None, None]


if __name__ == "__main__":
    key = jax.random.PRNGKey(0)

    def make_inputs(B, C, H, W, reduction=16):
        hidden = max(C // reduction, 1)
        kx, k1, k2 = jax.random.split(jax.random.fold_in(key, C * H * W), 3)
        x = jax.random.normal(kx, (B, C, H, W), dtype=jnp.float32)
        # nn.Linear weight shapes: (out_features, in_features), bias=False.
        w1 = jax.random.normal(k1, (hidden, C), dtype=jnp.float32) * 0.1
        w2 = jax.random.normal(k2, (C, hidden), dtype=jnp.float32) * 0.1
        return x, w1, w2

    # 1) Fused single-kernel path (per-batch slab fits VMEM).
    x, w1, w2 = make_inputs(2, 32, 16, 16)
    out = jax.block_until_ready(jax.jit(se_layer)(x, w1, w2))
    ref = se_layer_ref(x, w1, w2)
    assert out.shape == x.shape
    assert jnp.allclose(out, ref, atol=1e-5, rtol=1e-5), "fused path mismatch"

    # 2) Two-pass fallback path, forced, with HW=196 exercising the masked
    #    partial last lane-tile (hw_tile=128 -> tail of 68 lanes).
    x, w1, w2 = make_inputs(2, 32, 14, 14)
    fallback_fn = jax.jit(functools.partial(
        se_layer, fused_max_slab_bytes=0, tile_max_bytes=16 * 1024))
    out = jax.block_until_ready(fallback_fn(x, w1, w2))
    ref = se_layer_ref(x, w1, w2)
    assert jnp.allclose(out, ref, atol=1e-5, rtol=1e-5), "fallback path mismatch"

    print("KERNEL_OK")
</pallas_src>

<mosaic_0001>
module attributes {stable_mosaic.version = 11 : i64} {
  func.func @_se_fused_kernel(%arg0: i32, %arg1: memref<1x32x256xf32, #tpu.memory_space<vmem>>, %arg2: memref<2x32xf32, #tpu.memory_space<vmem>>, %arg3: memref<32x2xf32, #tpu.memory_space<vmem>>, %arg4: memref<1x32x256xf32, #tpu.memory_space<vmem>>) attributes {dimension_semantics = [#tpu.dimension_semantics<parallel>], iteration_bounds = array<i64: 2>, scalar_prefetch = 0 : i64, scratch_operands = 0 : i64, tpu.core_type = #tpu.core_type<tc>, window_params = [{transform_indices = @transform_0, window_bounds = array<i64: 1, 32, 256>}, {pipeline_mode = #tpu.pipeline_mode<synchronous>, transform_indices = @transform_1, window_bounds = array<i64: 2, 32>}, {pipeline_mode = #tpu.pipeline_mode<synchronous>, transform_indices = @transform_2, window_bounds = array<i64: 32, 2>}, {transform_indices = @transform_3, window_bounds = array<i64: 1, 32, 256>}]} {
    %c0 = arith.constant 0 : index
    %c0_0 = arith.constant 0 : index
    %c0_1 = arith.constant 0 : index
    %0 = vector.load %arg1[%c0, %c0_0, %c0_1] : memref<1x32x256xf32, #tpu.memory_space<vmem>>, vector<1x32x256xf32>
    %1 = vector.shape_cast %0 : vector<1x32x256xf32> to vector<32x256xf32>
    %cst = arith.constant dense<0.000000e+00> : vector<32xf32>
    %2 = vector.multi_reduction <add>, %1, %cst [1] : vector<32x256xf32> to vector<32xf32>
    %3 = vector.shape_cast %2 : vector<32xf32> to vector<32x1xf32>
    %c0_2 = arith.constant 0 : index
    %c0_3 = arith.constant 0 : index
    %4 = vector.load %arg2[%c0_2, %c0_3] : memref<2x32xf32, #tpu.memory_space<vmem>>, vector<2x32xf32>
    %cst_4 = arith.constant dense<0.000000e+00> : vector<2x1xf32>
    %5 = tpu.matmul %4, %3, %cst_4 {dimension_numbers = #tpu.dot_dimension_numbers<[1], [0], [0], [1], [0, 0, 1, 1], [], []>} : vector<2x32xf32>, vector<32x1xf32>, vector<2x1xf32> -> vector<2x1xf32>
    %cst_5 = arith.constant 0.000000e+00 : f32
    %6 = vector.broadcast %cst_5 : f32 to vector<2x1xf32>
    %7 = arith.maximumf %5, %6 : vector<2x1xf32>
    %c0_6 = arith.constant 0 : index
    %c0_7 = arith.constant 0 : index
    %8 = vector.load %arg3[%c0_6, %c0_7] : memref<32x2xf32, #tpu.memory_space<vmem>>, vector<32x2xf32>
    %cst_8 = arith.constant dense<0.000000e+00> : vector<32x1xf32>
    %9 = tpu.matmul %8, %7, %cst_8 {dimension_numbers = #tpu.dot_dimension_numbers<[1], [0], [0], [1], [0, 0, 1, 1], [], []>} : vector<32x2xf32>, vector<2x1xf32>, vector<32x1xf32> -> vector<32x1xf32>
    %10 = arith.negf %9 : vector<32x1xf32>
    %11 = math.exp %10 : vector<32x1xf32>
    %cst_9 = arith.constant 1.000000e+00 : f32
    %12 = vector.broadcast %cst_9 : f32 to vector<32x1xf32>
    %13 = arith.addf %12, %11 : vector<32x1xf32>
    %14 = arith.divf %12, %13 : vector<32x1xf32>
    %15 = vector.broadcast %14 : vector<32x1xf32> to vector<32x256xf32>
    %16 = arith.mulf %1, %15 : vector<32x256xf32>
    %c0_10 = arith.constant 0 : index
    %c0_11 = arith.constant 0 : index
    %c0_12 = arith.constant 0 : index
    %17 = vector.load %arg4[%c0_10, %c0_11, %c0_12] : memref<1x32x256xf32, #tpu.memory_space<vmem>>, vector<1x32x256xf32>
    %18 = vector.shape_cast %17 : vector<1x32x256xf32> to vector<32x256xf32>
    %19 = vector.shape_cast %16 : vector<32x256xf32> to vector<1x32x256xf32>
    tpu.vector_store %arg4[%c0_10, %c0_11, %c0_12], %19 {strides = array<i32>} : memref<1x32x256xf32, #tpu.memory_space<vmem>>, vector<1x32x256xf32>,
    return
  }
  func.func @transform_0(%arg0: i32) -> (i32, i32, i32) {
    %c0_i32 = arith.constant 0 : i32
    %c0_i32_0 = arith.constant 0 : i32
    %c0_i32_1 = arith.constant 0 : i32
    return %arg0, %c0_i32, %c0_i32_0 : i32, i32, i32
  }
  func.func @transform_1(%arg0: i32) -> (i32, i32) {
    %c0_i32 = arith.constant 0 : i32
    %c0_i32_0 = arith.constant 0 : i32
    %c0_i32_1 = arith.constant 0 : i32
    return %c0_i32, %c0_i32_0 : i32, i32
  }
  func.func @transform_2(%arg0: i32) -> (i32, i32) {
    %c0_i32 = arith.constant 0 : i32
    %c0_i32_0 = arith.constant 0 : i32
    %c0_i32_1 = arith.constant 0 : i32
    return %c0_i32, %c0_i32_0 : i32, i32
  }
  func.func @transform_3(%arg0: i32) -> (i32, i32, i32) {
    %c0_i32 = arith.constant 0 : i32
    %c0_i32_0 = arith.constant 0 : i32
    %c0_i32_1 = arith.constant 0 : i32
    return %arg0, %c0_i32, %c0_i32_0 : i32, i32, i32
  }
}

</mosaic_0001>

<llo_original>
// kernel: se_layer.1
$region0: #{se_layer.1}
  #allocation0 [shape = 'u32[]', space=smem, size = 0x4, offset = 0x4, fixed_abs, tag = 'smem constant byte address 0x4 - core index']
  #allocation1 [shape = 'u32[72,128]{1,0:T(1,128)}', space=vmem, size = 0x9000, scoped, tag = 'internal scratch']
  %s0 = inlined_call_operand.vmem [shape: f32[2,32,256], index: 0, kind: input, shape index: {}]
  %s1 = inlined_call_operand.vmem [shape: f32[2,32], index: 1, kind: input, shape index: {}]
  %s2 = inlined_call_operand.vmem [shape: f32[32,2], index: 2, kind: input, shape index: {}]
  %s3 = inlined_call_operand.vmem [shape: f32[2,32,256], index: 3, kind: output, shape index: {}]
  %s4 = sld [smem:[#allocation0]]
  $region45: #{se_layer.1} parent=0
    _
  %s6 = ssub.s32 1, %s4
  %s7 = scalar_select 0, %s6, %s4
  loop: start=0, step=1, limit=4
  $region2: #{se_layer.1} parent=0 // loop_pre_header
    _
  $region3: #{se_layer.1} parent=0 // loop_header
    %s9 = sphi 0, %s13
    %p10 = scmp.ge.s32.totalorder %s9, 4
    %s19 = sphi 0, %s21
    %s22 = sphi 0, %s19
    %s23 = sphi 0, %s22
    %s39 = sphi 0, %s23
    %s43 = sphi 0, %s43
    %s45 = sphi 0, %s43
    %s46 = sphi 0, %s45
    %s60 = sphi 0, %s46
    %s64 = sphi 0, %s64
    %s66 = sphi 0, %s64
    %s67 = sphi 0, %s66
    %s81 = sphi 0, %s67
    %s87 = sphi 0, %s89
    %s90 = sphi 0, %s87
    %s91 = sphi 0, %s90
    %s107 = sphi 0, %s91
  $region4: #{se_layer.1} parent=0 // loop_header_branch
    %12 = sbr.rel (%p10) target = $region8
  $region5: #{se_layer.1} parent=0 // loop_body
    %s14 = ssub.s32 %s9, 1
    %s15 = ssub.s32 %s9, 2
    %s16 = sadd.s32 %s9, 1
    %s17 = ssub.s32 %s9, %s16
    %p18 = scmp.eq.s32.totalorder %s17, 0
    %s20 = sadd.s32 %s19, 1
    %s21 = scalar_select %p18, %s19, %s20
    %p24 = pneg %p18
    %p25 = scmp.eq.s32.totalorder %s9, 1
    %p26 = por %p24, %p25
    %p27 = scmp.ne.s32.totalorder %s19, %s22
    %p28 = scmp.eq.s32.totalorder %s9, 0
    %p29 = por %p27, %p28
    %p30 = scmp.ne.s32.totalorder %s19, %s22
    %p31 = scmp.eq.s32.totalorder %s14, 1
    %p32 = por %p30, %p31
    %p33 = scmp.ne.s32.totalorder %s22, %s23
    %p34 = scmp.eq.s32.totalorder %s14, 0
    %p35 = por %p33, %p34
    %p36 = scmp.ne.s32.totalorder %s22, %s23
    %p37 = scmp.eq.s32.totalorder %s15, 1
    %p38 = por %p36, %p37
    %p40 = scmp.ne.s32.totalorder %s23, %s39
    %p41 = scmp.eq.s32.totalorder %s15, 0
    %p42 = por %p40, %p41
    %s44 = sadd.s32 %s43, 1
    %p47 = scmp.eq.s32.totalorder %s9, 1
    %p48 = scmp.ne.s32.totalorder %s43, %s45
    %p49 = scmp.eq.s32.totalorder %s9, 0
    %p50 = por %p48, %p49
    %p51 = scmp.ne.s32.totalorder %s43, %s45
    %p52 = scmp.eq.s32.totalorder %s14, 1
    %p53 = por %p51, %p52
    %p54 = scmp.ne.s32.totalorder %s45, %s46
    %p55 = scmp.eq.s32.totalorder %s14, 0
    %p56 = por %p54, %p55
    %p57 = scmp.ne.s32.totalorder %s45, %s46
    %p58 = scmp.eq.s32.totalorder %s15, 1
    %p59 = por %p57, %p58
    %p61 = scmp.ne.s32.totalorder %s46, %s60
    %p62 = scmp.eq.s32.totalorder %s15, 0
    %p63 = por %p61, %p62
    %s65 = sadd.s32 %s64, 1
    %p68 = scmp.eq.s32.totalorder %s9, 1
    %p69 = scmp.ne.s32.totalorder %s64, %s66
    %p70 = scmp.eq.s32.totalorder %s9, 0
    %p71 = por %p69, %p70
    %p72 = scmp.ne.s32.totalorder %s64, %s66
    %p73 = scmp.eq.s32.totalorder %s14, 1
    %p74 = por %p72, %p73
    %p75 = scmp.ne.s32.totalorder %s66, %s67
    %p76 = scmp.eq.s32.totalorder %s14, 0
    %p77 = por %p75, %p76
    %p78 = scmp.ne.s32.totalorder %s66, %s67
    %p79 = scmp.eq.s32.totalorder %s15, 1
    %p80 = por %p78, %p79
    %p82 = scmp.ne.s32.totalorder %s67, %s81
    %p83 = scmp.eq.s32.totalorder %s15, 0
    %p84 = por %p82, %p83
    %s85 = ssub.s32 %s9, %s16
    %p86 = scmp.eq.s32.totalorder %s85, 0
    %s88 = sadd.s32 %s87, 1
    %s89 = scalar_select %p86, %s87, %s88
    %p92 = pneg %p86
    %p93 = scmp.eq.s32.totalorder %s9, 1
    %p94 = por %p92, %p93
    %p95 = scmp.ne.s32.totalorder %s87, %s90
    %p96 = scmp.eq.s32.totalorder %s9, 0
    %p97 = por %p95, %p96
    %p98 = scmp.ne.s32.totalorder %s87, %s90
    %p99 = scmp.eq.s32.totalorder %s14, 1
    %p100 = por %p98, %p99
    %p101 = scmp.ne.s32.totalorder %s90, %s91
    %p102 = scmp.eq.s32.totalorder %s14, 0
    %p103 = por %p101, %p102
    %p104 = scmp.ne.s32.totalorder %s90, %s91
    %p105 = scmp.eq.s32.totalorder %s15, 1
    %p106 = por %p104, %p105
    %p108 = scmp.ne.s32.totalorder %s91, %s107
    %p109 = scmp.eq.s32.totalorder %s15, 0
    %p110 = por %p108, %p109
    %p111 = scmp.le.s32.totalorder 1, %s9
    %p112 = scmp.lt.s32.totalorder %s9, 3
    %p113 = pnand %p111, %p112
    %p114 = pneg %p113
    // Predicated region
    $region9: #{se_layer.1} parent=5 // pred_check
      _
    $region10: #{se_layer.1} parent=5 // pred_check_branch
      %116 = sbr.rel (%p113) target = $region12
    $region11: #{se_layer.1} parent=5 // pred_region
      %s117 = ssub.s32 %s9, 1
      // Predicated region
      $region13: #{se_layer.1} parent=11 // pred_check
        %p118 = pneg %p56
      $region14: #{se_layer.1} parent=11 // pred_check_branch
        %120 = sbr.rel (%p118) target = $region16
      $region15: #{se_layer.1} parent=11 // pred_region
        _
      $region16: #{se_layer.1} parent=11 // pred_fallthru
        _
      // Predicated region
      $region17: #{se_layer.1} parent=11 // pred_check
        %p121 = pneg %p77
      $region18: #{se_layer.1} parent=11 // pred_check_branch
        %123 = sbr.rel (%p121) target = $region20
      $region19: #{se_layer.1} parent=11 // pred_region
        _
      $region20: #{se_layer.1} parent=11 // pred_fallthru
        _
    $region12: #{se_layer.1} parent=5 // pred_fallthru
      _
    %p124 = scmp.lt.s32.totalorder %s9, 2
    // Predicated region
    $region21: #{se_layer.1} parent=5 // pred_check
      %p125 = pneg %p124
    $region22: #{se_layer.1} parent=5 // pred_check_branch
      %127 = sbr.rel (%p125) target = $region24
    $region23: #{se_layer.1} parent=5 // pred_region
      // Predicated region
      $region25: #{se_layer.1} parent=23 // pred_check
        %p128 = pneg %p29
      $region26: #{se_layer.1} parent=23 // pred_check_branch
        %130 = sbr.rel (%p128) target = $region28
      $region27: #{se_layer.1} parent=23 // pred_region
        %p131 = scmp.lt.s32.totalorder %s9, 1
        %s132 = scalar_select %p131, %s9, 1
        %s133 = smul.addr %s132, 8
        %s134 = smul.addr %s133, 8
        %s135 = scalar_lea.vmem %s0, %s134
      $region28: #{se_layer.1} parent=23 // pred_fallthru
        _
    $region24: #{se_layer.1} parent=5 // pred_fallthru
      _
    %p136 = scmp.le.s32.totalorder 1, %s9
    %p137 = scmp.lt.s32.totalorder %s9, 3
    %p138 = pnand %p136, %p137
    %p139 = pneg %p138
    // Predicated region
    $region29: #{se_layer.1} parent=5 // pred_check
      _
    $region30: #{se_layer.1} parent=5 // pred_check_branch
      %141 = sbr.rel (%p138) target = $region32
    $region31: #{se_layer.1} parent=5 // pred_region
      %s142 = ssub.s32 %s9, 1
      %p143 = scmp.lt.s32.totalorder %s14, 1
      %s144 = scalar_select %p143, %s14, 1
      %s145 = smul.addr %s144, 8
      %s146 = smul.addr %s145, 8
      %s147 = scalar_lea.vmem %s0, %s146
      %p148 = pneg %p35
      %p149 = pneg %p32
      %p150 = pneg %p56
      %p151 = pneg %p53
      %p152 = pneg %p77
      %p153 = pneg %p74
      %p154 = pneg %p103
      %p155 = pneg %p100
      %p156 = scmp.lt.s32.totalorder %s14, 1
      %s157 = scalar_select %p156, %s14, 1
      %s158 = smul.addr %s157, 8
      %s159 = smul.addr %s158, 8
      %s160 = scalar_lea.vmem %s3, %s159
      %p161 = scmp.lt.s32.totalorder %s14, 1
      %s162 = scalar_select %p161, %s14, 1
      %s163 = smul.addr %s162, 8
      %s164 = smul.addr %s163, 8
      %s165 = scalar_lea.vmem %s0, %s164
      %p166 = scmp.lt.s32.totalorder %s14, 1
      %s167 = scalar_select %p166, %s14, 1
      %s168 = smul.addr %s167, 8
      %s169 = smul.addr %s168, 8
      %s170 = scalar_lea.vmem %s3, %s169
      %v171 = vld [vmem:[%s165] sm:$0xff]
      %v172 = vld [vmem:[%s165 + $0x8] sm:$0xff]
      %v173 = vld [vmem:[%s165 + $0x10] sm:$0xff]
      %v174 = vld [vmem:[%s165 + $0x18] sm:$0xff]
      %v175 = vld [vmem:[%s165 + $0x20] sm:$0xff]
      %v176 = vld [vmem:[%s165 + $0x28] sm:$0xff]
      %v177 = vld [vmem:[%s165 + $0x30] sm:$0xff]
      %v178 = vld [vmem:[%s165 + $0x38] sm:$0xff]
      %v179 = vadd.f32 %v171, %v172
      %180 = vadd.xlane.f32.xlu0 %v179
      %v181 = vpop.xlane.xlu0 %180
      %v182 = vadd.f32 %v173, %v174
      %183 = vadd.xlane.f32.xlu0 %v182
      %v184 = vpop.xlane.xlu0 %183
      %v185 = vadd.f32 %v175, %v176
      %186 = vadd.xlane.f32.xlu0 %v185
      %v187 = vpop.xlane.xlu0 %186
      %v188 = vadd.f32 %v177, %v178
      %189 = vadd.xlane.f32.xlu0 %v188
      %v190 = vpop.xlane.xlu0 %189
      %v191 = vld [vmem:[%s1] sm:$0x3]
      %vm192 = vcmask 261120
      %v194 = vsel %vm192, %v191, 0
      %196 = vmatpush.msra.mxu0 0.0
      %197 = vmatpush.msra.mxu0 0.0
      %198 = vmatpush.msra.mxu0 0.0
      %199 = vmatpush.msra.mxu0 0.0
      %200 = vmatpush.msra.mxu0 0.0
      %201 = vmatpush.msra.mxu0 0.0
      %202 = vmatpush.msra.mxu0 0.0
      %203 = vmatpush.msra.mxu0 0.0
      %204 = vmatpush.msra.mxu0 0.0
      %205 = vmatpush.msra.mxu0 0.0
      %206 = vmatpush.msra.mxu0 0.0
      %207 = vmatpush.msra.mxu0 0.0
      %208 = vmatpush.msra.mxu0 %v190
      %209 = vmatpush.msra.mxu0 %v187
      %210 = vmatpush.msra.mxu0 %v184
      %211 = vmatpush.msra.mxu0 %v181
      %212 = vmatmul.f32.gmra.mxu0 %v194
      %v213 = vpop.f32.mrf.mxu0
      %v214 = vadd.f32 0.0, %v213
      %215 = vdwg.mxu0
      %v216 = vmax.f32 %v214, 0.0
      %v217 = vld [vmem:[%s2] sm:$0xff]
      %v218 = vld [vmem:[%s2 + $0x8] sm:$0xff]
      %v219 = vld [vmem:[%s2 + $0x10] sm:$0xff]
      %v220 = vld [vmem:[%s2 + $0x18] sm:$0xff]
      %vm221 = vcmask 15360
      %v223 = vsel %vm221, %v217, 0
      %v226 = vsel %vm221, %v218, 0
      %v229 = vsel %vm221, %v219, 0
      %v232 = vsel %vm221, %v220, 0
      %vm234 = vcmask 1041408
      %v236 = vsel %vm234, %v216, 0
      %238 = vmatpush.msra.mxu0 0.0
      %239 = vmatpush.msra.mxu0 0.0
      %240 = vmatpush.msra.mxu0 0.0
      %241 = vmatpush.msra.mxu0 0.0
      %242 = vmatpush.msra.mxu0 0.0
      %243 = vmatpush.msra.mxu0 0.0
      %244 = vmatpush.msra.mxu0 0.0
      %245 = vmatpush.msra.mxu0 0.0
      %246 = vmatpush.msra.mxu0 0.0
      %247 = vmatpush.msra.mxu0 0.0
      %248 = vmatpush.msra.mxu0 0.0
      %249 = vmatpush.msra.mxu0 0.0
      %250 = vmatpush.msra.mxu0 0.0
      %251 = vmatpush.msra.mxu0 0.0
      %252 = vmatpush.msra.mxu0 0.0
      %253 = vmatpush.msra.mxu0 %v236
      %254 = vmatmul.f32.gmra.mxu0 %v223
      %v255 = vpop.f32.mrf.mxu0
      %v256 = vadd.f32 0.0, %v255
      %257 = vmatmul.f32.gmra.mxu0 %v226
      %v258 = vpop.f32.mrf.mxu0
      %v259 = vadd.f32 0.0, %v258
      %260 = vmatmul.f32.gmra.mxu0 %v229
      %v261 = vpop.f32.mrf.mxu0
      %v262 = vadd.f32 0.0, %v261
      %263 = vmatmul.f32.gmra.mxu0 %v232
      %v264 = vpop.f32.mrf.mxu0
      %v265 = vadd.f32 0.0, %v264
      %266 = vdwg.mxu0
      %v267 = vxor.u32 %v256, 2147483648
      %v268 = vxor.u32 %v259, 2147483648
      %v269 = vxor.u32 %v262, 2147483648
      %v270 = vxor.u32 %v265, 2147483648
      %v271 = vmul.f32 %v267, 1.442695
      %v272 = vpow.pop %v271
      %v273 = vmul.f32 %v268, 1.442695
      %v274 = vpow.pop %v273
      %v275 = vmul.f32 %v269, 1.442695
      %v276 = vpow.pop %v275
      %v277 = vmul.f32 %v270, 1.442695
      %v278 = vpow.pop %v277
      %v279 = vadd.f32 %v272, 1.0
      %v280 = vadd.f32 %v274, 1.0
      %v281 = vadd.f32 %v276, 1.0
      %v282 = vadd.f32 %v278, 1.0
      %v283 = vrcp.pop %v279
      %v284 = vmul.f32 %v279, %v283
      %v285 = vsub.f32 1.0, %v284
      %v286 = vmul.f32 %v283, %v285
      %v287 = vadd.f32 %v283, %v286
      %vm288 = vweird.f32 %v279
      %vm289 = vweird.f32 %v283
      %vm290 = vmor %vm288, %vm289
      %v291 = vsel %vm290, %v283, %v287
      %v292 = vand.u32 2147483647, %v279
      %vm293 = vcmp.eq.f32.partialorder %v292, 8.507059e+37
      %v294 = vand.u32 %v279, 2147483648
      %v295 = vor.u32 1.1754944e-38, %v294
      %v296 = vsel %vm293, %v295, %v291
      %v297 = vmul.f32 1.0, %v296
      %v298 = vrcp.pop %v280
      %v299 = vmul.f32 %v280, %v298
      %v300 = vsub.f32 1.0, %v299
      %v301 = vmul.f32 %v298, %v300
      %v302 = vadd.f32 %v298, %v301
      %vm303 = vweird.f32 %v280
      %vm304 = vweird.f32 %v298
      %vm305 = vmor %vm303, %vm304
      %v306 = vsel %vm305, %v298, %v302
      %v307 = vand.u32 2147483647, %v280
      %vm308 = vcmp.eq.f32.partialorder %v307, 8.507059e+37
      %v309 = vand.u32 %v280, 2147483648
      %v310 = vor.u32 1.1754944e-38, %v309
      %v311 = vsel %vm308, %v310, %v306
      %v312 = vmul.f32 1.0, %v311
      %v313 = vrcp.pop %v281
      %v314 = vmul.f32 %v281, %v313
      %v315 = vsub.f32 1.0, %v314
      %v316 = vmul.f32 %v313, %v315
      %v317 = vadd.f32 %v313, %v316
      %vm318 = vweird.f32 %v281
      %vm319 = vweird.f32 %v313
      %vm320 = vmor %vm318, %vm319
      %v321 = vsel %vm320, %v313, %v317
      %v322 = vand.u32 2147483647, %v281
      %vm323 = vcmp.eq.f32.partialorder %v322, 8.507059e+37
      %v324 = vand.u32 %v281, 2147483648
      %v325 = vor.u32 1.1754944e-38, %v324
      %v326 = vsel %vm323, %v325, %v321
      %v327 = vmul.f32 1.0, %v326
      %v328 = vrcp.pop %v282
      %v329 = vmul.f32 %v282, %v328
      %v330 = vsub.f32 1.0, %v329
      %v331 = vmul.f32 %v328, %v330
      %v332 = vadd.f32 %v328, %v331
      %vm333 = vweird.f32 %v282
      %vm334 = vweird.f32 %v328
      %vm335 = vmor %vm333, %vm334
      %v336 = vsel %vm335, %v328, %v332
      %v337 = vand.u32 2147483647, %v282
      %vm338 = vcmp.eq.f32.partialorder %v337, 8.507059e+37
      %v339 = vand.u32 %v282, 2147483648
      %v340 = vor.u32 1.1754944e-38, %v339
      %v341 = vsel %vm338, %v340, %v336
      %v342 = vmul.f32 1.0, %v341
      %344 = vset.pattern.permute.xlu0 0
      %345 = vperm.xlu0 %344, %v297
      %v346 = vpop.permute.xlu0 %345
      %349 = vset.pattern.permute.xlu0 0
      %350 = vperm.xlu0 %349, %v312
      %v351 = vpop.permute.xlu0 %350
      %354 = vset.pattern.permute.xlu0 0
      %355 = vperm.xlu0 %354, %v327
      %v356 = vpop.permute.xlu0 %355
      %359 = vset.pattern.permute.xlu0 0
      %360 = vperm.xlu0 %359, %v342
      %v361 = vpop.permute.xlu0 %360
      %v363 = vmul.f32 %v171, %v346
      %v364 = vmul.f32 %v172, %v346
      %v365 = vmul.f32 %v173, %v351
      %v366 = vmul.f32 %v174, %v351
      %v367 = vmul.f32 %v175, %v356
      %v368 = vmul.f32 %v176, %v356
      %v369 = vmul.f32 %v177, %v361
      %v370 = vmul.f32 %v178, %v361
      %371 = vst [vmem:[%s170] sm:$0xff] %v363
      %372 = vst [vmem:[%s170 + $0x8] sm:$0xff] %v364
      %373 = vst [vmem:[%s170 + $0x10] sm:$0xff] %v365
      %374 = vst [vmem:[%s170 + $0x18] sm:$0xff] %v366
      %375 = vst [vmem:[%s170 + $0x20] sm:$0xff] %v367
      %376 = vst [vmem:[%s170 + $0x28] sm:$0xff] %v368
      %377 = vst [vmem:[%s170 + $0x30] sm:$0xff] %v369
      %378 = vst [vmem:[%s170 + $0x38] sm:$0xff] %v370
      %p379 = scmp.lt.s32.totalorder %s14, 1
      %s380 = scalar_select %p379, %s14, 1
      %s381 = smul.addr %s380, 8
      %s382 = smul.addr %s381, 8
      %s383 = scalar_lea.vmem %s3, %s382
      // Predicated region
      $region33: #{se_layer.1} parent=31 // pred_check
        %p384 = pneg %p100
      $region34: #{se_layer.1} parent=31 // pred_check_branch
        %386 = sbr.rel (%p384) target = $region36
      $region35: #{se_layer.1} parent=31 // pred_region
        _
      $region36: #{se_layer.1} parent=31 // pred_fallthru
        _
    $region32: #{se_layer.1} parent=5 // pred_fallthru
      _
    %p387 = scmp.le.s32.totalorder 2, %s9
    // Predicated region
    $region37: #{se_layer.1} parent=5 // pred_check
      %p388 = pneg %p387
    $region38: #{se_layer.1} parent=5 // pred_check_branch
      %390 = sbr.rel (%p388) target = $region40
    $region39: #{se_layer.1} parent=5 // pred_region
      %s391 = ssub.s32 %s9, 2
      // Predicated region
      $region41: #{se_layer.1} parent=39 // pred_check
        %p392 = pneg %p106
      $region42: #{se_layer.1} parent=39 // pred_check_branch
        %394 = sbr.rel (%p392) target = $region44
      $region43: #{se_layer.1} parent=39 // pred_region
        %p395 = scmp.lt.s32.totalorder %s15, 1
        %s396 = scalar_select %p395, %s15, 1
        %s397 = smul.addr %s396, 8
        %s398 = smul.addr %s397, 8
        %s399 = scalar_lea.vmem %s3, %s398
      $region44: #{se_layer.1} parent=39 // pred_fallthru
        _
    $region40: #{se_layer.1} parent=5 // pred_fallthru
      _
  $region6: #{se_layer.1} parent=0 // loop_footer
    %s13 = sadd.s32 1, %s9
  $region7: #{se_layer.1} parent=0 // loop_footer_branch
    %8 = sbr.rel target = $region3
  $region8: #{se_layer.1} parent=0 // loop_exit
    _

</llo_original>
